<compile_context>
chip_gen: v7x
topology: tpu7x:2x2x1
jax: 0.10.0
libtpu: 0.0.40
codegen_flags: <defaults>
</compile_context>

<pallas_src>
import functools

import jax
import jax.numpy as jnp
from jax.experimental import pallas as pl
from jax.experimental.pallas import tpu as pltpu


def _one_vs_rest_kernel(x_ref, w_ref, b_ref, labels_ref,
                        out_ref, loss_ref, acc_ref, *, inv_count):
    C = out_ref.shape[1]
    step = pl.program_id(0)

    @pl.when(step == 0)
    def _init():
        acc_ref[0] = 0.0

    # One fused MXU matmul for all heads: (TB, E) @ (E, 2C) -> (TB, 2C).
    r = jnp.dot(x_ref[...], w_ref[...],
                preferred_element_type=jnp.float32) + b_ref[...]
    l0 = r[:, :C]          # class-0 logit of every head
    l1 = r[:, C:]          # class-1 logit of every head

    d = l1 - l0            # outputs = stacked_outputs[:, :, 1] - [:, :, 0]
    out_ref[...] = d.astype(out_ref.dtype)

    # labels binarized: label >= 0 -> class 1 else class 0.
    # 2-way cross entropy as stable softplus of the margin:
    #   y==1: ce = log(1 + exp(-d));   y==0: ce = log(1 + exp(d))
    z = jnp.where(labels_ref[...] >= 0, -d, d)
    ce = jnp.maximum(z, 0.0) + jnp.log(1.0 + jnp.exp(-jnp.abs(z)))

    acc_ref[0] += jnp.sum(ce)

    @pl.when(step == pl.num_programs(0) - 1)
    def _finalize():
        # mean over all (sample, class) pairs == mean of per-class mean losses
        loss_ref[0] = acc_ref[0] * inv_count


def one_vs_rest(x, w, b, labels, *, tb=None):
    """x: (B, E); w: (E, 2C) packed [W0|W1]; b: (1, 2C); labels: (B, C) raw."""
    B, E = x.shape
    C2 = w.shape[1]
    C = C2 // 2
    if tb is None:
        tb = B
    assert B % tb == 0, "batch must be a multiple of the batch tile"
    grid = (B // tb,)

    kernel = functools.partial(_one_vs_rest_kernel,
                               inv_count=1.0 / float(B * C))

    outputs, loss = pl.pallas_call(
        kernel,
        grid=grid,
        in_specs=[
            pl.BlockSpec((tb, E), lambda i: (i, 0)),            # x (batch-tiled)
            pl.BlockSpec((E, C2), lambda i: (0, 0)),            # packed weights
            pl.BlockSpec((1, C2), lambda i: (0, 0)),            # packed biases
            pl.BlockSpec((tb, C), lambda i: (i, 0)),            # raw labels
        ],
        out_specs=[
            pl.BlockSpec((tb, C), lambda i: (i, 0)),            # margins
            pl.BlockSpec(memory_space=pltpu.MemorySpace.SMEM),  # scalar loss
        ],
        out_shape=[
            jax.ShapeDtypeStruct((B, C), jnp.float32),
            jax.ShapeDtypeStruct((1,), jnp.float32),
        ],
        scratch_shapes=[pltpu.SMEM((1,), jnp.float32)],
        compiler_params=pltpu.CompilerParams(
            dimension_semantics=("arbitrary",)),   # batch axis carries the loss sum
    )(x, w, b, labels)
    return outputs, loss[0]


def _reference(x, w0, w1, b0, b1, labels):
    l0 = x.astype(jnp.float32) @ w0 + b0
    l1 = x.astype(jnp.float32) @ w1 + b1
    y = jnp.where(labels >= 0, 1.0, 0.0)
    m = jnp.maximum(l0, l1)
    lse = m + jnp.log(jnp.exp(l0 - m) + jnp.exp(l1 - m))
    picked = jnp.where(y == 1.0, l1, l0)
    ce = lse - picked
    return l1 - l0, jnp.mean(ce)


if __name__ == "__main__":
    B, E, C = 16, 32, 4   # batch, embed_size, num_classes
    TB = 8                # batch tile (exercises the tiled/accumulate path)

    key = jax.random.PRNGKey(0)
    kx, kl, kw, kb = jax.random.split(key, 4)

    x = jax.random.normal(kx, (B, E), dtype=jnp.float32)
    # raw labels contain negative / non-negative values (binarized in-kernel)
    labels = jax.random.randint(kl, (B, C), -1, 2).astype(jnp.float32)

    # Per-head params: head i has weight (2, E) and bias (2,).
    w_all = 0.1 * jax.random.normal(kw, (C, 2, E), dtype=jnp.float32)
    b_all = 0.1 * jax.random.normal(kb, (C, 2), dtype=jnp.float32)
    w0 = jnp.transpose(w_all[:, 0, :])            # (E, C)  class-0 columns
    w1 = jnp.transpose(w_all[:, 1, :])            # (E, C)  class-1 columns
    b0 = b_all[:, 0].reshape(1, C)
    b1 = b_all[:, 1].reshape(1, C)

    # Pack into one fused operand pair for the single-matmul kernel.
    w_packed = jnp.concatenate([w0, w1], axis=1)  # (E, 2C)
    b_packed = jnp.concatenate([b0, b1], axis=1)  # (1, 2C)

    outputs, loss = one_vs_rest(x, w_packed, b_packed, labels, tb=TB)
    jax.block_until_ready((outputs, loss))

    ref_out, ref_loss = _reference(x, w0, w1, b0, b1, labels)
    assert outputs.shape == (B, C)
    assert jnp.allclose(outputs, ref_out, atol=1e-5)
    assert jnp.allclose(loss, ref_loss, atol=1e-5)

    print("KERNEL_OK")
</pallas_src>

<mosaic_0001>
module attributes {stable_mosaic.version = 11 : i64} {
  func.func @_one_vs_rest_kernel(%arg0: i32, %arg1: memref<8x32xf32, #tpu.memory_space<vmem>>, %arg2: memref<32x8xf32, #tpu.memory_space<vmem>>, %arg3: memref<1x8xf32, #tpu.memory_space<vmem>>, %arg4: memref<8x4xf32, #tpu.memory_space<vmem>>, %arg5: memref<8x4xf32, #tpu.memory_space<vmem>>, %arg6: memref<1xf32, #tpu.memory_space<smem>>, %arg7: memref<1xf32, #tpu.memory_space<smem>>) attributes {dimension_semantics = [#tpu.dimension_semantics<arbitrary>], iteration_bounds = array<i64: 2>, scalar_prefetch = 0 : i64, scratch_operands = 1 : i64, tpu.core_type = #tpu.core_type<tc>, window_params = [{transform_indices = @transform_0, window_bounds = array<i64: 8, 32>}, {pipeline_mode = #tpu.pipeline_mode<synchronous>, transform_indices = @transform_1, window_bounds = array<i64: 32, 8>}, {pipeline_mode = #tpu.pipeline_mode<synchronous>, transform_indices = @transform_2, window_bounds = array<i64: 1, 8>}, {transform_indices = @transform_3, window_bounds = array<i64: 8, 4>}, {transform_indices = @transform_4, window_bounds = array<i64: 8, 4>}, {transform_indices = @transform_5, window_bounds = array<i64: 1>}]} {
    %c0_i32 = arith.constant 0 : i32
    %0 = arith.cmpi eq, %arg0, %c0_i32 : i32
    %1 = arith.extui %0 : i1 to i32
    %c0_i32_0 = arith.constant 0 : i32
    %2 = arith.cmpi ne, %1, %c0_i32_0 : i32
    scf.if %2 {
      %cst_19 = arith.constant 0.000000e+00 : f32
      %c0_20 = arith.constant 0 : index
      %39 = memref.load %arg7[%c0_20] : memref<1xf32, #tpu.memory_space<smem>>
      memref.store %cst_19, %arg7[%c0_20] : memref<1xf32, #tpu.memory_space<smem>>
    } else {
    }
    %c0 = arith.constant 0 : index
    %c0_1 = arith.constant 0 : index
    %3 = vector.load %arg1[%c0, %c0_1] : memref<8x32xf32, #tpu.memory_space<vmem>>, vector<8x32xf32>
    %c0_2 = arith.constant 0 : index
    %c0_3 = arith.constant 0 : index
    %4 = vector.load %arg2[%c0_2, %c0_3] : memref<32x8xf32, #tpu.memory_space<vmem>>, vector<32x8xf32>
    %cst = arith.constant dense<0.000000e+00> : vector<8x8xf32>
    %5 = tpu.matmul %3, %4, %cst {dimension_numbers = #tpu.dot_dimension_numbers<[1], [0], [0], [1], [0, 0, 1, 1], [], []>} : vector<8x32xf32>, vector<32x8xf32>, vector<8x8xf32> -> vector<8x8xf32>
    %c0_4 = arith.constant 0 : index
    %c0_5 = arith.constant 0 : index
    %6 = vector.load %arg3[%c0_4, %c0_5] : memref<1x8xf32, #tpu.memory_space<vmem>>, vector<1x8xf32>
    %7 = vector.broadcast %6 : vector<1x8xf32> to vector<8x8xf32>
    %8 = arith.addf %5, %7 : vector<8x8xf32>
    %9 = vector.extract_strided_slice %8 {offsets = [0, 0], sizes = [8, 4], strides = [1, 1]} : vector<8x8xf32> to vector<8x4xf32>
    %10 = vector.extract_strided_slice %8 {offsets = [0, 4], sizes = [8, 4], strides = [1, 1]} : vector<8x8xf32> to vector<8x4xf32>
    %11 = arith.subf %10, %9 : vector<8x4xf32>
    %c0_6 = arith.constant 0 : index
    %c0_7 = arith.constant 0 : index
    %12 = vector.load %arg5[%c0_6, %c0_7] : memref<8x4xf32, #tpu.memory_space<vmem>>, vector<8x4xf32>
    tpu.vector_store %arg5[%c0_6, %c0_7], %11 {strides = array<i32>} : memref<8x4xf32, #tpu.memory_space<vmem>>, vector<8x4xf32>,
    %c0_8 = arith.constant 0 : index
    %c0_9 = arith.constant 0 : index
    %13 = vector.load %arg4[%c0_8, %c0_9] : memref<8x4xf32, #tpu.memory_space<vmem>>, vector<8x4xf32>
    %cst_10 = arith.constant 0.000000e+00 : f32
    %14 = vector.broadcast %cst_10 : f32 to vector<8x4xf32>
    %15 = arith.cmpf oge, %13, %14 : vector<8x4xf32>
    %cst_11 = arith.constant 0.000000e+00 : f32
    %16 = vector.broadcast %cst_11 : f32 to vector<8x4xf32>
    %17 = arith.subf %16, %11 : vector<8x4xf32>
    %18 = arith.select %15, %17, %11 : vector<8x4xi1>, vector<8x4xf32>
    %cst_12 = arith.constant 0.000000e+00 : f32
    %19 = vector.broadcast %cst_12 : f32 to vector<8x4xf32>
    %20 = arith.maximumf %18, %19 : vector<8x4xf32>
    %21 = math.absf %18 : vector<8x4xf32>
    %cst_13 = arith.constant 0.000000e+00 : f32
    %22 = vector.broadcast %cst_13 : f32 to vector<8x4xf32>
    %23 = arith.subf %22, %21 : vector<8x4xf32>
    %24 = math.exp %23 : vector<8x4xf32>
    %cst_14 = arith.constant 1.000000e+00 : f32
    %25 = vector.broadcast %cst_14 : f32 to vector<8x4xf32>
    %26 = arith.addf %25, %24 : vector<8x4xf32>
    %27 = math.log %26 : vector<8x4xf32>
    %28 = arith.addf %20, %27 : vector<8x4xf32>
    %c0_15 = arith.constant 0 : index
    %29 = memref.load %arg7[%c0_15] : memref<1xf32, #tpu.memory_space<smem>>
    %30 = vector.shape_cast %28 : vector<8x4xf32> to vector<1x8x4xf32>
    %cst_16 = arith.constant dense<0.000000e+00> : vector<1xf32>
    %31 = vector.multi_reduction <add>, %30, %cst_16 [1, 2] : vector<1x8x4xf32> to vector<1xf32>
    %32 = vector.shape_cast %31 : vector<1xf32> to vector<1x1x1xf32>
    %33 = vector.extract %32[0, 0, 0] : f32 from vector<1x1x1xf32>
    %34 = arith.addf %29, %33 : f32
    %c0_17 = arith.constant 0 : index
    %35 = memref.load %arg7[%c0_17] : memref<1xf32, #tpu.memory_space<smem>>
    memref.store %34, %arg7[%c0_17] : memref<1xf32, #tpu.memory_space<smem>>
    %c1_i32 = arith.constant 1 : i32
    %36 = arith.cmpi eq, %arg0, %c1_i32 : i32
    %37 = arith.extui %36 : i1 to i32
    %c0_i32_18 = arith.constant 0 : i32
    %38 = arith.cmpi ne, %37, %c0_i32_18 : i32
    scf.if %38 {
      %c0_19 = arith.constant 0 : index
      %39 = memref.load %arg7[%c0_19] : memref<1xf32, #tpu.memory_space<smem>>
      %cst_20 = arith.constant 1.562500e-02 : f32
      %40 = arith.mulf %39, %cst_20 : f32
      %c0_21 = arith.constant 0 : index
      %41 = memref.load %arg6[%c0_21] : memref<1xf32, #tpu.memory_space<smem>>
      memref.store %40, %arg6[%c0_21] : memref<1xf32, #tpu.memory_space<smem>>
    } else {
    }
    return
  }
  func.func @transform_0(%arg0: i32) -> (i32, i32) {
    %c0_i32 = arith.constant 0 : i32
    %c0_i32_0 = arith.constant 0 : i32
    return %arg0, %c0_i32 : i32, i32
  }
  func.func @transform_1(%arg0: i32) -> (i32, i32) {
    %c0_i32 = arith.constant 0 : i32
    %c0_i32_0 = arith.constant 0 : i32
    %c0_i32_1 = arith.constant 0 : i32
    return %c0_i32, %c0_i32_0 : i32, i32
  }
  func.func @transform_2(%arg0: i32) -> (i32, i32) {
    %c0_i32 = arith.constant 0 : i32
    %c0_i32_0 = arith.constant 0 : i32
    %c0_i32_1 = arith.constant 0 : i32
    return %c0_i32, %c0_i32_0 : i32, i32
  }
  func.func @transform_3(%arg0: i32) -> (i32, i32) {
    %c0_i32 = arith.constant 0 : i32
    %c0_i32_0 = arith.constant 0 : i32
    return %arg0, %c0_i32 : i32, i32
  }
  func.func @transform_4(%arg0: i32) -> (i32, i32) {
    %c0_i32 = arith.constant 0 : i32
    %c0_i32_0 = arith.constant 0 : i32
    return %arg0, %c0_i32 : i32, i32
  }
  func.func @transform_5(%arg0: i32) -> i32 {
    %c0_i32 = arith.constant 0 : i32
    %c0_i32_0 = arith.constant 0 : i32
    return %c0_i32 : i32
  }
}

</mosaic_0001>

<llo_original>
// kernel: tpu_custom_call.1
$region0: #{tpu_custom_call.1}
  #allocation0 [shape = 'u32[]', space=smem, size = 0x4, offset = 0x4, fixed_abs, tag = 'smem constant byte address 0x4 - core index']
  #allocation1 [shape = 'u32[144,128]{1,0:T(1,128)}', space=vmem, size = 0x12000, scoped, tag = 'internal scratch']
  #allocation2 [shape = 'f32[1]{0:T(128)}', space=smem, size = 0x200, scoped, tag = 'scratch operand']
  %s0 = inlined_call_operand.vmem [shape: f32[16,32], index: 0, kind: input, shape index: {}]
  %s1 = inlined_call_operand.vmem [shape: f32[32,8], index: 1, kind: input, shape index: {}]
  %s2 = inlined_call_operand.vmem [shape: f32[1,8], index: 2, kind: input, shape index: {}]
  %s3 = inlined_call_operand.vmem [shape: f32[16,4], index: 3, kind: input, shape index: {}]
  %s4 = inlined_call_operand.vmem [shape: f32[16,4], index: 4, kind: output, shape index: {0}]
  %s5 = inlined_call_operand.hbm [shape: f32[1], index: 5, kind: output, shape index: {1}]
  %6 = xla_tuple %s4, %s5
  %s7 = sld [smem:[#allocation0]]
  $region65: #{tpu_custom_call.1} parent=0
    _
  %s9 = ssub.s32 1, %s7
  %s10 = scalar_select 0, %s9, %s7
  $region1: #{tpu_custom_call.1} parent=0
    #allocation3 [shape = 'u8[512]{0}', space=smem, size = 0x200, scoped, tag = 'output window, operand 1, single buffered']
    #allocation4 [shape = 's32[2]{0}', space=sflag, size = 0x8, scoped, tag = 'scoped memory for tpu_custom_call.1']
    %11 = vsyncpa [#allocation4], 0
    loop: start=0, step=1, limit=4
    $region2: #{tpu_custom_call.1} parent=1 // loop_pre_header
      _
    $region3: #{tpu_custom_call.1} parent=1 // loop_header
      %s13 = sphi 0, %s17
      %p14 = scmp.ge.s32.totalorder %s13, 4
      %s23 = sphi 0, %s25
      %s26 = sphi 0, %s23
      %s27 = sphi 0, %s26
      %s43 = sphi 0, %s27
      %s47 = sphi 0, %s47
      %s49 = sphi 0, %s47
      %s50 = sphi 0, %s49
      %s64 = sphi 0, %s50
      %s68 = sphi 0, %s68
      %s70 = sphi 0, %s68
      %s71 = sphi 0, %s70
      %s85 = sphi 0, %s71
      %s91 = sphi 0, %s93
      %s94 = sphi 0, %s91
      %s95 = sphi 0, %s94
      %s111 = sphi 0, %s95
      %s117 = sphi 0, %s119
      %s120 = sphi 0, %s117
      %s121 = sphi 0, %s120
      %s137 = sphi 0, %s121
      %s141 = sphi 0, %s141
      %s143 = sphi 0, %s141
      %s144 = sphi 0, %s143
      %s158 = sphi 0, %s144
    $region4: #{tpu_custom_call.1} parent=1 // loop_header_branch
      %16 = sbr.rel (%p14) target = $region8
    $region5: #{tpu_custom_call.1} parent=1 // loop_body
      %s18 = ssub.s32 %s13, 1
      %s19 = ssub.s32 %s13, 2
      %s20 = sadd.s32 %s13, 1
      %s21 = ssub.s32 %s13, %s20
      %p22 = scmp.eq.s32.totalorder %s21, 0
      %s24 = sadd.s32 %s23, 1
      %s25 = scalar_select %p22, %s23, %s24
      %p28 = pneg %p22
      %p29 = scmp.eq.s32.totalorder %s13, 1
      %p30 = por %p28, %p29
      %p31 = scmp.ne.s32.totalorder %s23, %s26
      %p32 = scmp.eq.s32.totalorder %s13, 0
      %p33 = por %p31, %p32
      %p34 = scmp.ne.s32.totalorder %s23, %s26
      %p35 = scmp.eq.s32.totalorder %s18, 1
      %p36 = por %p34, %p35
      %p37 = scmp.ne.s32.totalorder %s26, %s27
      %p38 = scmp.eq.s32.totalorder %s18, 0
      %p39 = por %p37, %p38
      %p40 = scmp.ne.s32.totalorder %s26, %s27
      %p41 = scmp.eq.s32.totalorder %s19, 1
      %p42 = por %p40, %p41
      %p44 = scmp.ne.s32.totalorder %s27, %s43
      %p45 = scmp.eq.s32.totalorder %s19, 0
      %p46 = por %p44, %p45
      %s48 = sadd.s32 %s47, 1
      %p51 = scmp.eq.s32.totalorder %s13, 1
      %p52 = scmp.ne.s32.totalorder %s47, %s49
      %p53 = scmp.eq.s32.totalorder %s13, 0
      %p54 = por %p52, %p53
      %p55 = scmp.ne.s32.totalorder %s47, %s49
      %p56 = scmp.eq.s32.totalorder %s18, 1
      %p57 = por %p55, %p56
      %p58 = scmp.ne.s32.totalorder %s49, %s50
      %p59 = scmp.eq.s32.totalorder %s18, 0
      %p60 = por %p58, %p59
      %p61 = scmp.ne.s32.totalorder %s49, %s50
      %p62 = scmp.eq.s32.totalorder %s19, 1
      %p63 = por %p61, %p62
      %p65 = scmp.ne.s32.totalorder %s50, %s64
      %p66 = scmp.eq.s32.totalorder %s19, 0
      %p67 = por %p65, %p66
      %s69 = sadd.s32 %s68, 1
      %p72 = scmp.eq.s32.totalorder %s13, 1
      %p73 = scmp.ne.s32.totalorder %s68, %s70
      %p74 = scmp.eq.s32.totalorder %s13, 0
      %p75 = por %p73, %p74
      %p76 = scmp.ne.s32.totalorder %s68, %s70
      %p77 = scmp.eq.s32.totalorder %s18, 1
      %p78 = por %p76, %p77
      %p79 = scmp.ne.s32.totalorder %s70, %s71
      %p80 = scmp.eq.s32.totalorder %s18, 0
      %p81 = por %p79, %p80
      %p82 = scmp.ne.s32.totalorder %s70, %s71
      %p83 = scmp.eq.s32.totalorder %s19, 1
      %p84 = por %p82, %p83
      %p86 = scmp.ne.s32.totalorder %s71, %s85
      %p87 = scmp.eq.s32.totalorder %s19, 0
      %p88 = por %p86, %p87
      %s89 = ssub.s32 %s13, %s20
      %p90 = scmp.eq.s32.totalorder %s89, 0
      %s92 = sadd.s32 %s91, 1
      %s93 = scalar_select %p90, %s91, %s92
      %p96 = pneg %p90
      %p97 = scmp.eq.s32.totalorder %s13, 1
      %p98 = por %p96, %p97
      %p99 = scmp.ne.s32.totalorder %s91, %s94
      %p100 = scmp.eq.s32.totalorder %s13, 0
      %p101 = por %p99, %p100
      %p102 = scmp.ne.s32.totalorder %s91, %s94
      %p103 = scmp.eq.s32.totalorder %s18, 1
      %p104 = por %p102, %p103
      %p105 = scmp.ne.s32.totalorder %s94, %s95
      %p106 = scmp.eq.s32.totalorder %s18, 0
      %p107 = por %p105, %p106
      %p108 = scmp.ne.s32.totalorder %s94, %s95
      %p109 = scmp.eq.s32.totalorder %s19, 1
      %p110 = por %p108, %p109
      %p112 = scmp.ne.s32.totalorder %s95, %s111
      %p113 = scmp.eq.s32.totalorder %s19, 0
      %p114 = por %p112, %p113
      %s115 = ssub.s32 %s13, %s20
      %p116 = scmp.eq.s32.totalorder %s115, 0
      %s118 = sadd.s32 %s117, 1
      %s119 = scalar_select %p116, %s117, %s118
      %p122 = pneg %p116
      %p123 = scmp.eq.s32.totalorder %s13, 1
      %p124 = por %p122, %p123
      %p125 = scmp.ne.s32.totalorder %s117, %s120
      %p126 = scmp.eq.s32.totalorder %s13, 0
      %p127 = por %p125, %p126
      %p128 = scmp.ne.s32.totalorder %s117, %s120
      %p129 = scmp.eq.s32.totalorder %s18, 1
      %p130 = por %p128, %p129
      %p131 = scmp.ne.s32.totalorder %s120, %s121
      %p132 = scmp.eq.s32.totalorder %s18, 0
      %p133 = por %p131, %p132
      %p134 = scmp.ne.s32.totalorder %s120, %s121
      %p135 = scmp.eq.s32.totalorder %s19, 1
      %p136 = por %p134, %p135
      %p138 = scmp.ne.s32.totalorder %s121, %s137
      %p139 = scmp.eq.s32.totalorder %s19, 0
      %p140 = por %p138, %p139
      %s142 = sadd.s32 %s141, 1
      %p145 = scmp.eq.s32.totalorder %s13, 1
      %p146 = scmp.ne.s32.totalorder %s141, %s143
      %p147 = scmp.eq.s32.totalorder %s13, 0
      %p148 = por %p146, %p147
      %p149 = scmp.ne.s32.totalorder %s141, %s143
      %p150 = scmp.eq.s32.totalorder %s18, 1
      %p151 = por %p149, %p150
      %p152 = scmp.ne.s32.totalorder %s143, %s144
      %p153 = scmp.eq.s32.totalorder %s18, 0
      %p154 = por %p152, %p153
      %p155 = scmp.ne.s32.totalorder %s143, %s144
      %p156 = scmp.eq.s32.totalorder %s19, 1
      %p157 = por %p155, %p156
      %p159 = scmp.ne.s32.totalorder %s144, %s158
      %p160 = scmp.eq.s32.totalorder %s19, 0
      %p161 = por %p159, %p160
      %p162 = scmp.le.s32.totalorder 1, %s13
      %p163 = scmp.lt.s32.totalorder %s13, 3
      %p164 = pnand %p162, %p163
      %p165 = pneg %p164
      // Predicated region
      $region9: #{tpu_custom_call.1} parent=5 // pred_check
        _
      $region10: #{tpu_custom_call.1} parent=5 // pred_check_branch
        %167 = sbr.rel (%p164) target = $region12
      $region11: #{tpu_custom_call.1} parent=5 // pred_region
        %s168 = ssub.s32 %s13, 1
        // Predicated region
        $region13: #{tpu_custom_call.1} parent=11 // pred_check
          %p169 = pneg %p60
        $region14: #{tpu_custom_call.1} parent=11 // pred_check_branch
          %171 = sbr.rel (%p169) target = $region16
        $region15: #{tpu_custom_call.1} parent=11 // pred_region
          _
        $region16: #{tpu_custom_call.1} parent=11 // pred_fallthru
          _
        // Predicated region
        $region17: #{tpu_custom_call.1} parent=11 // pred_check
          %p172 = pneg %p81
        $region18: #{tpu_custom_call.1} parent=11 // pred_check_branch
          %174 = sbr.rel (%p172) target = $region20
        $region19: #{tpu_custom_call.1} parent=11 // pred_region
          _
        $region20: #{tpu_custom_call.1} parent=11 // pred_fallthru
          _
      $region12: #{tpu_custom_call.1} parent=5 // pred_fallthru
        _
      %p175 = scmp.lt.s32.totalorder %s13, 2
      // Predicated region
      $region21: #{tpu_custom_call.1} parent=5 // pred_check
        %p176 = pneg %p175
      $region22: #{tpu_custom_call.1} parent=5 // pred_check_branch
        %178 = sbr.rel (%p176) target = $region24
      $region23: #{tpu_custom_call.1} parent=5 // pred_region
        // Predicated region
        $region25: #{tpu_custom_call.1} parent=23 // pred_check
          %p179 = pneg %p33
        $region26: #{tpu_custom_call.1} parent=23 // pred_check_branch
          %181 = sbr.rel (%p179) target = $region28
        $region27: #{tpu_custom_call.1} parent=23 // pred_region
          %p182 = scmp.lt.s32.totalorder %s13, 1
          %s183 = scalar_select %p182, %s13, 1
          %s184 = smul.addr %s183, 8
          %s185 = scalar_lea.vmem %s0, %s184
        $region28: #{tpu_custom_call.1} parent=23 // pred_fallthru
          _
        // Predicated region
        $region29: #{tpu_custom_call.1} parent=23 // pred_check
          %p186 = pneg %p101
        $region30: #{tpu_custom_call.1} parent=23 // pred_check_branch
          %188 = sbr.rel (%p186) target = $region32
        $region31: #{tpu_custom_call.1} parent=23 // pred_region
          %p189 = scmp.lt.s32.totalorder %s13, 1
          %s190 = scalar_select %p189, %s13, 1
          %s191 = smul.addr %s190, 8
          %s192 = scalar_lea.vmem %s3, %s191
        $region32: #{tpu_custom_call.1} parent=23 // pred_fallthru
          _
      $region24: #{tpu_custom_call.1} parent=5 // pred_fallthru
        _
      %p193 = scmp.le.s32.totalorder 1, %s13
      %p194 = scmp.lt.s32.totalorder %s13, 3
      %p195 = pnand %p193, %p194
      %p196 = pneg %p195
      // Predicated region
      $region33: #{tpu_custom_call.1} parent=5 // pred_check
        _
      $region34: #{tpu_custom_call.1} parent=5 // pred_check_branch
        %198 = sbr.rel (%p195) target = $region36
      $region35: #{tpu_custom_call.1} parent=5 // pred_region
        %s199 = ssub.s32 %s13, 1
        %p200 = scmp.lt.s32.totalorder %s18, 1
        %s201 = scalar_select %p200, %s18, 1
        %s202 = smul.addr %s201, 8
        %s203 = scalar_lea.vmem %s0, %s202
        %p204 = pneg %p39
        %p205 = pneg %p36
        %p206 = pneg %p60
        %p207 = pneg %p57
        %p208 = pneg %p81
        %p209 = pneg %p78
        %p210 = scmp.lt.s32.totalorder %s18, 1
        %s211 = scalar_select %p210, %s18, 1
        %s212 = smul.addr %s211, 8
        %s213 = scalar_lea.vmem %s3, %s212
        %p214 = pneg %p107
        %p215 = pneg %p104
        %p216 = pneg %p133
        %p217 = pneg %p130
        %p218 = scmp.lt.s32.totalorder %s18, 1
        %s219 = scalar_select %p218, %s18, 1
        %s220 = smul.addr %s219, 8
        %s221 = scalar_lea.vmem %s4, %s220
        %p222 = pneg %p154
        %p223 = pneg %p151
        %p224 = scmp.lt.s32.totalorder %s18, 1
        %s225 = scalar_select %p224, %s18, 1
        %s226 = smul.addr %s225, 8
        %s227 = scalar_lea.vmem %s0, %s226
        %p228 = scmp.lt.s32.totalorder %s18, 1
        %s229 = scalar_select %p228, %s18, 1
        %s230 = smul.addr %s229, 8
        %s231 = scalar_lea.vmem %s3, %s230
        %p232 = scmp.lt.s32.totalorder %s18, 1
        %s233 = scalar_select %p232, %s18, 1
        %s234 = smul.addr %s233, 8
        %s235 = scalar_lea.vmem %s4, %s234
        %p236 = scmp.eq.s32.totalorder %s18, 0
        // Predicated region
        $region37: #{tpu_custom_call.1} parent=35 // pred_check
          %p237 = pneg %p236
        $region38: #{tpu_custom_call.1} parent=35 // pred_check_branch
          %239 = sbr.rel (%p237) target = $region40
        $region39: #{tpu_custom_call.1} parent=35 // pred_region
          %s240 = scalar_lea.smem [#allocation2], 0
          %241 = sst [smem:[%s240]] 0.0
        $region40: #{tpu_custom_call.1} parent=35 // pred_fallthru
          _
        %v242 = vld [vmem:[%s227] sm:$0xff]
        %v243 = vld [vmem:[%s1] sm:$0xff]
        %v244 = vld [vmem:[%s1 + $0x8] sm:$0xff]
        %v245 = vld [vmem:[%s1 + $0x10] sm:$0xff]
        %v246 = vld [vmem:[%s1 + $0x18] sm:$0xff]
        %v247 = vld [vmem:[%s2] sm:$0x1]
        %v249 = vlaneseq
        %v250 = vshrl.u32 %v249, 7
        %v251 = vsub.s32 0, %v250
        %v252 = vrot.slane %v247, %v251
        %vm254 = vcmask 261120
        %v256 = vsel %vm254, %v242, 0
        %258 = vmatprep.subr.mxu0 0.0
        %259 = vmatpush1.msra.mxu0 %v243
        %260 = vmatprep.subr.mxu0 0.0
        %261 = vmatpush1.msra.mxu0 %v244
        %262 = vmatprep.subr.mxu0 0.0
        %263 = vmatpush1.msra.mxu0 %v245
        %264 = vmatprep.subr.mxu0 0.0
        %265 = vmatpush1.msra.mxu0 %v246
        %266 = vmatprep.subr.mxu0 0.0
        %267 = vmatpush1.msra.mxu0 0.0
        %268 = vmatprep.subr.mxu0 0.0
        %269 = vmatpush1.msra.mxu0 0.0
        %270 = vmatprep.subr.mxu0 0.0
        %271 = vmatpush1.msra.mxu0 0.0
        %272 = vmatprep.subr.mxu0 0.0
        %273 = vmatpush1.msra.mxu0 0.0
        %274 = vmatprep.subr.mxu0 0.0
        %275 = vmatpush1.msra.mxu0 0.0
        %276 = vmatprep.subr.mxu0 0.0
        %277 = vmatpush1.msra.mxu0 0.0
        %278 = vmatprep.subr.mxu0 0.0
        %279 = vmatpush1.msra.mxu0 0.0
        %280 = vmatprep.subr.mxu0 0.0
        %281 = vmatpush1.msra.mxu0 0.0
        %282 = vmatprep.subr.mxu0 0.0
        %283 = vmatpush1.msra.mxu0 0.0
        %284 = vmatprep.subr.mxu0 0.0
        %285 = vmatpush1.msra.mxu0 0.0
        %286 = vmatprep.subr.mxu0 0.0
        %287 = vmatpush1.msra.mxu0 0.0
        %288 = vmatprep.subr.mxu0 0.0
        %289 = vmatpush1.msra.mxu0 0.0
        %290 = vmatprep.subr.mxu0 0.0
        %291 = vmatpush1.msra.mxu0 0.0
        %292 = vmatprep.subr.mxu0 0.0
        %293 = vmatpush1.msra.mxu0 0.0
        %294 = vmatprep.subr.mxu0 0.0
        %295 = vmatpush1.msra.mxu0 0.0
        %296 = vmatprep.subr.mxu0 0.0
        %297 = vmatpush1.msra.mxu0 0.0
        %298 = vmatprep.subr.mxu0 0.0
        %299 = vmatpush1.msra.mxu0 0.0
        %300 = vmatprep.subr.mxu0 0.0
        %301 = vmatpush1.msra.mxu0 0.0
        %302 = vmatprep.subr.mxu0 0.0
        %303 = vmatpush1.msra.mxu0 0.0
        %304 = vmatprep.subr.mxu0 0.0
        %305 = vmatpush1.msra.mxu0 0.0
        %306 = vmatprep.subr.mxu0 0.0
        %307 = vmatpush1.msra.mxu0 0.0
        %308 = vmatprep.subr.mxu0 0.0
        %309 = vmatpush1.msra.mxu0 0.0
        %310 = vmatprep.subr.mxu0 0.0
        %311 = vmatpush1.msra.mxu0 0.0
        %312 = vmatprep.subr.mxu0 0.0
        %313 = vmatpush1.msra.mxu0 0.0
        %314 = vmatprep.subr.mxu0 0.0
        %315 = vmatpush1.msra.mxu0 0.0
        %316 = vmatprep.subr.mxu0 0.0
        %317 = vmatpush1.msra.mxu0 0.0
        %318 = vmatprep.subr.mxu0 0.0
        %319 = vmatpush1.msra.mxu0 0.0
        %320 = vmatprep.subr.mxu0 0.0
        %321 = vmatpush1.msra.mxu0 0.0
        %322 = vmatprep.mubr.f32.mxu0 0.0
        %323 = vmatmul.mubr.f32.gmra.mrb[0].mxu0 %v256
        %v324 = vpop.f32.mrb[0].mxu0
        %v325 = vadd.f32 %v252, %v324
        %v326 = vpop.f32.mrb[0].mxu0
        %327 = vdwg.mxu0
        %329 = vrot.lane.b32.xlu0 %v325, 4
        %v330 = vpop.permute.xlu0 %329
        %v332 = vsub.f32 %v325, %v330
        %334 = vrot.lane.b32.xlu0 %v332, 124
        %v335 = vpop.permute.xlu0 %334
        %vm337 = vcmask 31744
        %338 = vst.msk [vmem:[%s235] sm:$0xff] %vm337, %v335
        %v339 = vld [vmem:[%s231] sm:$0xff]
        %vm340 = vcmp.ge.f32.partialorder %v339, 0.0
        %v341 = vsub.f32 0.0, %v332
        %343 = vrot.lane.b32.xlu0 %v341, 124
        %v344 = vpop.permute.xlu0 %343
        %v346 = vsel %vm340, %v344, %v335
        %v347 = vmax.f32 %v346, 0.0
        %v348 = vand.u32 2147483647, %v346
        %v349 = vsub.f32 0.0, %v348
        %v350 = vmul.f32 %v349, 1.442695
        %v351 = vpow.pop %v350
        %v352 = vadd.f32 %v351, 1.0
        %v353 = vlog2.pop %v352
        %v354 = vmul.f32 %v353, 0.6931472
        %v355 = vadd.f32 %v347, %v354
        %s356 = sld [smem:[#allocation2]]
        %v357 = vsel %vm337, %v355, 0.0
        %358 = vadd.xlane.f32.xlu0 %v357
        %v359 = vpop.xlane.xlu0 %358
        %v360 = vrot.slane %v359, 4
        %v361 = vadd.f32 %v359, %v360
        %v362 = vrot.slane %v361, 2
        %v363 = vadd.f32 %v361, %v362
        %v364 = vrot.slane %v363, 1
        %v365 = vadd.f32 %v363, %v364
        %s366 = vtos %v365
        %s367 = sadd.f32 %s356, %s366
        %s368 = scalar_lea.smem [#allocation2], 0
        %369 = sst [smem:[%s368]] %s367
        %p370 = scmp.eq.s32.totalorder %s18, 1
        // Predicated region
        $region41: #{tpu_custom_call.1} parent=35 // pred_check
          %p371 = pneg %p370
        $region42: #{tpu_custom_call.1} parent=35 // pred_check_branch
          %373 = sbr.rel (%p371) target = $region44
        $region43: #{tpu_custom_call.1} parent=35 // pred_region
          %s374 = sld [smem:[#allocation2]]
          %s375 = smul.f32 %s374, 0.015625
          %s376 = scalar_lea.smem [#allocation3], 0
          %377 = sst [smem:[%s376]] %s375
        $region44: #{tpu_custom_call.1} parent=35 // pred_fallthru
          _
        %p378 = scmp.lt.s32.totalorder %s18, 1
        %s379 = scalar_select %p378, %s18, 1
        %s380 = smul.addr %s379, 8
        %s381 = scalar_lea.vmem %s4, %s380
        // Predicated region
        $region45: #{tpu_custom_call.1} parent=35 // pred_check
          %p382 = pneg %p130
        $region46: #{tpu_custom_call.1} parent=35 // pred_check_branch
          %384 = sbr.rel (%p382) target = $region48
        $region47: #{tpu_custom_call.1} parent=35 // pred_region
          _
        $region48: #{tpu_custom_call.1} parent=35 // pred_fallthru
          _
        // Predicated region
        $region49: #{tpu_custom_call.1} parent=35 // pred_check
          %p385 = pneg %p151
        $region50: #{tpu_custom_call.1} parent=35 // pred_check_branch
          %387 = sbr.rel (%p385) target = $region52
        $region51: #{tpu_custom_call.1} parent=35 // pred_region
          %s389 = ssub.s32 16, 16
          %390 = vsyncadd [#allocation4], %s389
          %393 = dma.smem_to_hbm [#allocation3], 16, %s5, [#allocation4]
        $region52: #{tpu_custom_call.1} parent=35 // pred_fallthru
          _
        // Predicated region
        $region53: #{tpu_custom_call.1} parent=35 // pred_check
          %p394 = pneg %p151
        $region54: #{tpu_custom_call.1} parent=35 // pred_check_branch
          %396 = sbr.rel (%p394) target = $region56
        $region55: #{tpu_custom_call.1} parent=35 // pred_region
          %397 = dma.done [#allocation4], 16
        $region56: #{tpu_custom_call.1} parent=35 // pred_fallthru
          _
        %398 = sfence
      $region36: #{tpu_custom_call.1} parent=5 // pred_fallthru
        _
      %p399 = scmp.le.s32.totalorder 2, %s13
      // Predicated region
      $region57: #{tpu_custom_call.1} parent=5 // pred_check
        %p400 = pneg %p399
      $region58: #{tpu_custom_call.1} parent=5 // pred_check_branch
        %402 = sbr.rel (%p400) target = $region60
      $region59: #{tpu_custom_call.1} parent=5 // pred_region
        %s403 = ssub.s32 %s13, 2
        // Predicated region
        $region61: #{tpu_custom_call.1} parent=59 // pred_check
          %p404 = pneg %p136
        $region62: #{tpu_custom_call.1} parent=59 // pred_check_branch
          %406 = sbr.rel (%p404) target = $region64
        $region63: #{tpu_custom_call.1} parent=59 // pred_region
          %p407 = scmp.lt.s32.totalorder %s19, 1
          %s408 = scalar_select %p407, %s19, 1
          %s409 = smul.addr %s408, 8
          %s410 = scalar_lea.vmem %s4, %s409
        $region64: #{tpu_custom_call.1} parent=59 // pred_fallthru
          _
      $region60: #{tpu_custom_call.1} parent=5 // pred_fallthru
        _
    $region6: #{tpu_custom_call.1} parent=1 // loop_footer
      %s17 = sadd.s32 1, %s13
    $region7: #{tpu_custom_call.1} parent=1 // loop_footer_branch
      %12 = sbr.rel target = $region3
    $region8: #{tpu_custom_call.1} parent=1 // loop_exit
      _
    %411 = vsyncpa [#allocation4], 1
    %s412 = scalar_lea.sflag [#allocation4], 1
    %413 = vsyncpa %s412, 1

</llo_original>
